<compile_context>
chip_gen: v6e
topology: v6e:2x2x1
jax: 0.10.0
libtpu: 0.0.40
codegen_flags: <defaults>
</compile_context>

<pallas_src>
import functools

import jax
import jax.numpy as jnp
from jax import lax
from jax.experimental import pallas as pl
from jax.experimental.pallas import tpu as pltpu


def _round_up(x, m):
    return ((x + m - 1) // m) * m


def _cdiv(a, b):
    return -(-a // b)


def _single_tile_kernel(pred_ref, tgt_ref, out_ref, *, F, fb, tr, need_mask):
    # Whole feature dim in one lane-dense tile: select -> lane reduce -> store.
    p = pred_ref[...].astype(jnp.float32)          # widen on the VPU
    sel = tgt_ref[...] == 0                        # compare in native dtype
    if need_mask:
        col = lax.broadcasted_iota(jnp.int32, (tr, fb), 1)
        sel = jnp.logical_and(sel, col < F)        # mask lanes past true F
    out_ref[...] = jnp.sum(jnp.where(sel, p, 0.0), axis=1, keepdims=True)


def _multi_tile_kernel(pred_ref, tgt_ref, out_ref, acc_ref, *, F, fb, tr,
                       need_mask):
    # pred_ref/tgt_ref: (tr, fb) tiles in native dtype.
    # out_ref: (tr, 1) f32 per-row sums (written once per row block).
    # acc_ref: (tr, 1) f32 VMEM scratch accumulator (tiny).
    k = pl.program_id(1)

    @pl.when(k == 0)
    def _():
        acc_ref[...] = jnp.zeros_like(acc_ref)

    p = pred_ref[...].astype(jnp.float32)          # widen on the VPU
    sel = tgt_ref[...] == 0                        # compare in native dtype
    if need_mask:
        # Mask lanes past the true feature extent F (only bites on the last
        # partial feature block; all-true elsewhere, cheap VPU work).
        col = k * fb + lax.broadcasted_iota(jnp.int32, (tr, fb), 1)
        sel = jnp.logical_and(sel, col < F)
    # Per-step XLU lane reduce into a narrow accumulator (hidden under DMA).
    acc_ref[...] += jnp.sum(jnp.where(sel, p, 0.0), axis=1, keepdims=True)

    @pl.when(k == pl.num_programs(1) - 1)
    def _():
        out_ref[...] = acc_ref[...]


def outer_att_loss(pred_heatmaps, target_heatmaps, size_average=True,
                   max_fb=2048, max_tr=512):
    """pred_heatmaps, target_heatmaps: (B, S, H, W), any float dtype."""
    B, S = pred_heatmaps.shape[0], pred_heatmaps.shape[1]
    rows = B * S

    # Keep native dtype (no wrapper-side upcast, no wrapper-side padding pass).
    pred = pred_heatmaps.reshape(rows, -1)
    tgt = target_heatmaps.reshape(rows, -1)
    F = pred.shape[1]

    itemsize = jnp.dtype(pred.dtype).itemsize
    # Minimum sublane tile by dtype packing (f32: 8, bf16/f16: 16, 1-byte: 32).
    sub = 8 if itemsize >= 4 else (16 if itemsize == 2 else 32)

    # Feature tile: lane-dense multiple of 128 not exceeding F (so only the
    # last feature block is partial); if F itself is tiny, take the full dim.
    if F <= 128:
        fb = F                                     # block == full array dim
    else:
        fb = min(max_fb, (F // 128) * 128)
    f_blocks = _cdiv(F, fb)
    need_mask = (F % fb) != 0

    # Row tile: aim for >=2 row blocks (v7x megacore) whenever rows permit.
    if rows <= sub:
        tr = rows                                  # block == full array dim
    else:
        tr = min(max_tr, _round_up(_cdiv(rows, 2), sub))
    r_blocks = _cdiv(rows, tr)

    out_shape = jax.ShapeDtypeStruct((rows, 1), jnp.float32)
    cparams = dict(vmem_limit_bytes=32 * 1024 * 1024)  # portable across v5e/v6e/v7x

    if f_blocks == 1:
        kernel = functools.partial(_single_tile_kernel, F=F, fb=fb, tr=tr,
                                   need_mask=need_mask)
        per_row = pl.pallas_call(
            kernel,
            out_shape=out_shape,
            grid_spec=pltpu.PrefetchScalarGridSpec(
                num_scalar_prefetch=0,
                grid=(r_blocks,),
                in_specs=[
                    pl.BlockSpec((tr, fb), lambda r: (r, 0)),
                    pl.BlockSpec((tr, fb), lambda r: (r, 0)),
                ],
                out_specs=pl.BlockSpec((tr, 1), lambda r: (r, 0)),
            ),
            compiler_params=pltpu.CompilerParams(
                dimension_semantics=("parallel",), **cparams),
        )(pred, tgt)
    else:
        kernel = functools.partial(_multi_tile_kernel, F=F, fb=fb, tr=tr,
                                   need_mask=need_mask)
        per_row = pl.pallas_call(
            kernel,
            out_shape=out_shape,
            grid_spec=pltpu.PrefetchScalarGridSpec(
                num_scalar_prefetch=0,
                grid=(r_blocks, f_blocks),
                in_specs=[
                    pl.BlockSpec((tr, fb), lambda r, k: (r, k)),
                    pl.BlockSpec((tr, fb), lambda r, k: (r, k)),
                ],
                out_specs=pl.BlockSpec((tr, 1), lambda r, k: (r, 0)),
                scratch_shapes=[pltpu.VMEM((tr, 1), jnp.float32)],
            ),
            compiler_params=pltpu.CompilerParams(
                dimension_semantics=("parallel", "arbitrary"), **cparams),
        )(pred, tgt)

    # Cheap epilogue in plain JAX (tiny (B, S) intermediate).
    per_bs = per_row[:, 0].reshape(B, S)
    l = jnp.mean(per_bs, axis=1)                   # mean over seq dim -> (B,)
    return jnp.mean(l) if size_average else jnp.sum(l)


def _reference(pred, tgt, size_average=True):
    B, S = pred.shape[0], pred.shape[1]
    p = pred.reshape(B, S, -1).astype(jnp.float32)
    t = tgt.reshape(B, S, -1)
    outer = p * (t == 0).astype(jnp.float32)
    l = jnp.sum(outer, axis=2)
    l = jnp.mean(l, axis=1)
    return jnp.mean(l) if size_average else jnp.sum(l)


if __name__ == "__main__":
    key = jax.random.PRNGKey(0)
    k1, k2, k3 = jax.random.split(key, 3)

    B, S, H, W = 2, 8, 16, 16
    pred = jax.random.uniform(k1, (B, S, H, W), dtype=jnp.float32)
    # Target with a sparse "inner" region so (target == 0) is nontrivial.
    tgt_vals = jax.random.uniform(k2, (B, S, H, W), dtype=jnp.float32)
    keep = jax.random.uniform(k3, (B, S, H, W), dtype=jnp.float32) > 0.7
    target = jnp.where(keep, tgt_vals, 0.0)

    out = outer_att_loss(pred, target, size_average=True)
    out = jax.block_until_ready(out)
    ref = _reference(pred, target, size_average=True)
    assert jnp.allclose(out, ref, rtol=1e-5, atol=1e-5), (out, ref)

    # Also exercise the size_average=False path.
    out2 = jax.block_until_ready(outer_att_loss(pred, target, size_average=False))
    ref2 = _reference(pred, target, size_average=False)
    assert jnp.allclose(out2, ref2, rtol=1e-5, atol=1e-5), (out2, ref2)

    # Exercise the multi-feature-block (reduction) path + partial edge tiles
    # with an odd, non-tile-multiple shape.
    B2, S2, H2, W2 = 3, 5, 20, 30                  # rows=15, F=600
    p2 = jax.random.uniform(k1, (B2, S2, H2, W2), dtype=jnp.float32)
    t2 = jnp.where(jax.random.uniform(k2, (B2, S2, H2, W2)) > 0.6,
                   jax.random.uniform(k3, (B2, S2, H2, W2)), 0.0)
    out3 = jax.block_until_ready(outer_att_loss(p2, t2, size_average=True,
                                                max_fb=256, max_tr=8))
    ref3 = _reference(p2, t2, size_average=True)
    assert jnp.allclose(out3, ref3, rtol=1e-5, atol=1e-5), (out3, ref3)

    print("KERNEL_OK")
</pallas_src>

<mosaic_0001>
module attributes {stable_mosaic.version = 11 : i64} {
  func.func @_single_tile_kernel(%arg0: i32, %arg1: memref<8x256xf32, #tpu.memory_space<vmem>>, %arg2: memref<8x256xf32, #tpu.memory_space<vmem>>, %arg3: memref<8x1xf32, #tpu.memory_space<vmem>>) attributes {dimension_semantics = [#tpu.dimension_semantics<parallel>], iteration_bounds = array<i64: 2>, scalar_prefetch = 0 : i64, scratch_operands = 0 : i64, tpu.core_type = #tpu.core_type<tc>, window_params = [{transform_indices = @transform_0, window_bounds = array<i64: 8, 256>}, {transform_indices = @transform_1, window_bounds = array<i64: 8, 256>}, {transform_indices = @transform_2, window_bounds = array<i64: 8, 1>}]} {
    %c0 = arith.constant 0 : index
    %c0_0 = arith.constant 0 : index
    %0 = vector.load %arg1[%c0, %c0_0] : memref<8x256xf32, #tpu.memory_space<vmem>>, vector<8x256xf32>
    %c0_1 = arith.constant 0 : index
    %c0_2 = arith.constant 0 : index
    %1 = vector.load %arg2[%c0_1, %c0_2] : memref<8x256xf32, #tpu.memory_space<vmem>>, vector<8x256xf32>
    %cst = arith.constant 0.000000e+00 : f32
    %2 = vector.broadcast %cst : f32 to vector<8x256xf32>
    %3 = arith.cmpf oeq, %1, %2 : vector<8x256xf32>
    %cst_3 = arith.constant 0.000000e+00 : f32
    %4 = vector.broadcast %cst_3 : f32 to vector<8x256xf32>
    %5 = arith.select %3, %0, %4 : vector<8x256xi1>, vector<8x256xf32>
    %cst_4 = arith.constant dense<0.000000e+00> : vector<8xf32>
    %6 = vector.multi_reduction <add>, %5, %cst_4 [1] : vector<8x256xf32> to vector<8xf32>
    %7 = vector.shape_cast %6 : vector<8xf32> to vector<8x1xf32>
    %c0_5 = arith.constant 0 : index
    %c0_6 = arith.constant 0 : index
    %8 = vector.load %arg3[%c0_5, %c0_6] : memref<8x1xf32, #tpu.memory_space<vmem>>, vector<8x1xf32>
    tpu.vector_store %arg3[%c0_5, %c0_6], %7 {strides = array<i32>} : memref<8x1xf32, #tpu.memory_space<vmem>>, vector<8x1xf32>,
    return
  }
  func.func @transform_0(%arg0: i32) -> (i32, i32) {
    %c0_i32 = arith.constant 0 : i32
    %c0_i32_0 = arith.constant 0 : i32
    return %arg0, %c0_i32 : i32, i32
  }
  func.func @transform_1(%arg0: i32) -> (i32, i32) {
    %c0_i32 = arith.constant 0 : i32
    %c0_i32_0 = arith.constant 0 : i32
    return %arg0, %c0_i32 : i32, i32
  }
  func.func @transform_2(%arg0: i32) -> (i32, i32) {
    %c0_i32 = arith.constant 0 : i32
    %c0_i32_0 = arith.constant 0 : i32
    return %arg0, %c0_i32 : i32, i32
  }
}

</mosaic_0001>

<llo_original>
// kernel: tpu_custom_call.1
$region0: #{tpu_custom_call.1}
  #allocation0 [shape = 'u32[]', space=smem, size = 0x4, offset = 0x4, fixed_abs, tag = 'smem constant byte address 0x4 - core index']
  #allocation1 [shape = 'u32[144,128]{1,0:T(1,128)}', space=vmem, size = 0x12000, scoped, tag = 'internal scratch']
  %s0 = inlined_call_operand.hbm [shape: f32[16,256], index: 0, kind: input, shape index: {}]
  %s1 = inlined_call_operand.hbm [shape: f32[16,256], index: 1, kind: input, shape index: {}]
  %s2 = inlined_call_operand.vmem [shape: f32[16,1], index: 2, kind: output, shape index: {}]
  %s3 = sld [smem:[#allocation0]]
  $region49: #{tpu_custom_call.1} parent=0
    _
  %s5 = ssub.s32 1, %s3
  %s6 = scalar_select 0, %s5, %s3
  $region1: #{tpu_custom_call.1} parent=0
    #allocation2 [shape = 'u8[16384]{0}', space=vmem, size = 0x4000, scoped, tag = 'input window, operand 0']
    #allocation3 [shape = 's32[2]{0}', space=sflag, size = 0x8, scoped, tag = 'scoped memory for tpu_custom_call.1']
    #allocation4 [shape = 'u8[16384]{0}', space=vmem, size = 0x4000, scoped, tag = 'input window, operand 1']
    #allocation5 [shape = 's32[2]{0}', space=sflag, size = 0x8, scoped, tag = 'scoped memory for tpu_custom_call.1']
    %7 = vsyncpa [#allocation3], 0
    %s8 = scalar_lea.sflag [#allocation3], 1
    %9 = vsyncpa %s8, 0
    %10 = vsyncpa [#allocation5], 0
    %s11 = scalar_lea.sflag [#allocation5], 1
    %12 = vsyncpa %s11, 0
    loop: start=0, step=1, limit=4
    $region2: #{tpu_custom_call.1} parent=1 // loop_pre_header
      _
    $region3: #{tpu_custom_call.1} parent=1 // loop_header
      %s14 = sphi 0, %s18
      %p15 = scmp.ge.s32.totalorder %s14, 4
      %s24 = sphi 0, %s26
      %s27 = sphi 0, %s24
      %s28 = sphi 0, %s27
      %s44 = sphi 0, %s28
      %s50 = sphi 0, %s52
      %s53 = sphi 0, %s50
      %s54 = sphi 0, %s53
      %s70 = sphi 0, %s54
      %s76 = sphi 0, %s78
      %s79 = sphi 0, %s76
      %s80 = sphi 0, %s79
      %s96 = sphi 0, %s80
    $region4: #{tpu_custom_call.1} parent=1 // loop_header_branch
      %17 = sbr.rel (%p15) target = $region8
    $region5: #{tpu_custom_call.1} parent=1 // loop_body
      %s19 = ssub.s32 %s14, 1
      %s20 = ssub.s32 %s14, 2
      %s21 = sadd.s32 %s14, 1
      %s22 = ssub.s32 %s14, %s21
      %p23 = scmp.eq.s32.totalorder %s22, 0
      %s25 = sadd.s32 %s24, 1
      %s26 = scalar_select %p23, %s24, %s25
      %p29 = pneg %p23
      %p30 = scmp.eq.s32.totalorder %s14, 1
      %p31 = por %p29, %p30
      %p32 = scmp.ne.s32.totalorder %s24, %s27
      %p33 = scmp.eq.s32.totalorder %s14, 0
      %p34 = por %p32, %p33
      %p35 = scmp.ne.s32.totalorder %s24, %s27
      %p36 = scmp.eq.s32.totalorder %s19, 1
      %p37 = por %p35, %p36
      %p38 = scmp.ne.s32.totalorder %s27, %s28
      %p39 = scmp.eq.s32.totalorder %s19, 0
      %p40 = por %p38, %p39
      %p41 = scmp.ne.s32.totalorder %s27, %s28
      %p42 = scmp.eq.s32.totalorder %s20, 1
      %p43 = por %p41, %p42
      %p45 = scmp.ne.s32.totalorder %s28, %s44
      %p46 = scmp.eq.s32.totalorder %s20, 0
      %p47 = por %p45, %p46
      %s48 = ssub.s32 %s14, %s21
      %p49 = scmp.eq.s32.totalorder %s48, 0
      %s51 = sadd.s32 %s50, 1
      %s52 = scalar_select %p49, %s50, %s51
      %p55 = pneg %p49
      %p56 = scmp.eq.s32.totalorder %s14, 1
      %p57 = por %p55, %p56
      %p58 = scmp.ne.s32.totalorder %s50, %s53
      %p59 = scmp.eq.s32.totalorder %s14, 0
      %p60 = por %p58, %p59
      %p61 = scmp.ne.s32.totalorder %s50, %s53
      %p62 = scmp.eq.s32.totalorder %s19, 1
      %p63 = por %p61, %p62
      %p64 = scmp.ne.s32.totalorder %s53, %s54
      %p65 = scmp.eq.s32.totalorder %s19, 0
      %p66 = por %p64, %p65
      %p67 = scmp.ne.s32.totalorder %s53, %s54
      %p68 = scmp.eq.s32.totalorder %s20, 1
      %p69 = por %p67, %p68
      %p71 = scmp.ne.s32.totalorder %s54, %s70
      %p72 = scmp.eq.s32.totalorder %s20, 0
      %p73 = por %p71, %p72
      %s74 = ssub.s32 %s14, %s21
      %p75 = scmp.eq.s32.totalorder %s74, 0
      %s77 = sadd.s32 %s76, 1
      %s78 = scalar_select %p75, %s76, %s77
      %p81 = pneg %p75
      %p82 = scmp.eq.s32.totalorder %s14, 1
      %p83 = por %p81, %p82
      %p84 = scmp.ne.s32.totalorder %s76, %s79
      %p85 = scmp.eq.s32.totalorder %s14, 0
      %p86 = por %p84, %p85
      %p87 = scmp.ne.s32.totalorder %s76, %s79
      %p88 = scmp.eq.s32.totalorder %s19, 1
      %p89 = por %p87, %p88
      %p90 = scmp.ne.s32.totalorder %s79, %s80
      %p91 = scmp.eq.s32.totalorder %s19, 0
      %p92 = por %p90, %p91
      %p93 = scmp.ne.s32.totalorder %s79, %s80
      %p94 = scmp.eq.s32.totalorder %s20, 1
      %p95 = por %p93, %p94
      %p97 = scmp.ne.s32.totalorder %s80, %s96
      %p98 = scmp.eq.s32.totalorder %s20, 0
      %p99 = por %p97, %p98
      %p100 = scmp.le.s32.totalorder 1, %s14
      %p101 = scmp.lt.s32.totalorder %s14, 3
      %p102 = pnand %p100, %p101
      %p103 = pneg %p102
      // Predicated region
      $region9: #{tpu_custom_call.1} parent=5 // pred_check
        _
      $region10: #{tpu_custom_call.1} parent=5 // pred_check_branch
        %105 = sbr.rel (%p102) target = $region12
      $region11: #{tpu_custom_call.1} parent=5 // pred_region
        %s106 = ssub.s32 %s14, 1
      $region12: #{tpu_custom_call.1} parent=5 // pred_fallthru
        _
      %p107 = scmp.lt.s32.totalorder %s14, 2
      // Predicated region
      $region13: #{tpu_custom_call.1} parent=5 // pred_check
        %p108 = pneg %p107
      $region14: #{tpu_custom_call.1} parent=5 // pred_check_branch
        %110 = sbr.rel (%p108) target = $region16
      $region15: #{tpu_custom_call.1} parent=5 // pred_region
        // Predicated region
        $region17: #{tpu_custom_call.1} parent=15 // pred_check
          %p111 = pneg %p34
        $region18: #{tpu_custom_call.1} parent=15 // pred_check_branch
          %113 = sbr.rel (%p111) target = $region20
        $region19: #{tpu_custom_call.1} parent=15 // pred_region
          %s114 = sand.u32 %s24, 1
          %s115 = scalar_lea.sflag [#allocation3], %s114
          %s116 = sand.u32 %s24, 1
          %s117 = smul.addr %s116, 16
          %s118 = scalar_lea.vmem [#allocation2], %s117
          %s120 = ssub.s32 256, 256
          %121 = vsyncadd %s115, %s120
          %s122 = smul.addr %s14, 2
          %s123 = smul.addr %s122, 128
          %s124 = scalar_lea.hbm %s0, %s123
          %s126 = sshll.u32 %s118, 4
          %s127 = int_to_ptr.vmem [resolvable:$true] %s126
          %129 = dma.hbm_to_vmem [thread:$0]  %s124, 256, %s127, %s115
        $region20: #{tpu_custom_call.1} parent=15 // pred_fallthru
          _
        // Predicated region
        $region21: #{tpu_custom_call.1} parent=15 // pred_check
          %p130 = pneg %p60
        $region22: #{tpu_custom_call.1} parent=15 // pred_check_branch
          %132 = sbr.rel (%p130) target = $region24
        $region23: #{tpu_custom_call.1} parent=15 // pred_region
          %s133 = sand.u32 %s50, 1
          %s134 = scalar_lea.sflag [#allocation5], %s133
          %s135 = sand.u32 %s50, 1
          %s136 = smul.addr %s135, 16
          %s137 = scalar_lea.vmem [#allocation4], %s136
          %s139 = ssub.s32 256, 256
          %140 = vsyncadd %s134, %s139
          %s141 = smul.addr %s14, 2
          %s142 = smul.addr %s141, 128
          %s143 = scalar_lea.hbm %s1, %s142
          %s145 = sshll.u32 %s137, 4
          %s146 = int_to_ptr.vmem [resolvable:$true] %s145
          %148 = dma.hbm_to_vmem [thread:$0]  %s143, 256, %s146, %s134
        $region24: #{tpu_custom_call.1} parent=15 // pred_fallthru
          _
      $region16: #{tpu_custom_call.1} parent=5 // pred_fallthru
        _
      %p149 = scmp.le.s32.totalorder 1, %s14
      %p150 = scmp.lt.s32.totalorder %s14, 3
      %p151 = pnand %p149, %p150
      %p152 = pneg %p151
      // Predicated region
      $region25: #{tpu_custom_call.1} parent=5 // pred_check
        _
      $region26: #{tpu_custom_call.1} parent=5 // pred_check_branch
        %154 = sbr.rel (%p151) target = $region28
      $region27: #{tpu_custom_call.1} parent=5 // pred_region
        %s155 = ssub.s32 %s14, 1
        %s156 = sand.u32 %s27, 1
        %s157 = scalar_lea.sflag [#allocation3], %s156
        %s158 = sand.u32 %s27, 1
        %s159 = smul.addr %s158, 16
        %s160 = scalar_lea.vmem [#allocation2], %s159
        // Predicated region
        $region29: #{tpu_custom_call.1} parent=27 // pred_check
          %p161 = pneg %p40
        $region30: #{tpu_custom_call.1} parent=27 // pred_check_branch
          %163 = sbr.rel (%p161) target = $region32
        $region31: #{tpu_custom_call.1} parent=27 // pred_region
          %164 = dma.done %s157, 256
        $region32: #{tpu_custom_call.1} parent=27 // pred_fallthru
          _
        %s165 = sand.u32 %s53, 1
        %s166 = scalar_lea.sflag [#allocation5], %s165
        %s167 = sand.u32 %s53, 1
        %s168 = smul.addr %s167, 16
        %s169 = scalar_lea.vmem [#allocation4], %s168
        // Predicated region
        $region33: #{tpu_custom_call.1} parent=27 // pred_check
          %p170 = pneg %p66
        $region34: #{tpu_custom_call.1} parent=27 // pred_check_branch
          %172 = sbr.rel (%p170) target = $region36
        $region35: #{tpu_custom_call.1} parent=27 // pred_region
          %173 = dma.done %s166, 256
        $region36: #{tpu_custom_call.1} parent=27 // pred_fallthru
          _
        %s174 = sand.u32 %s27, 1
        %s175 = scalar_lea.sflag [#allocation3], %s174
        %s176 = sand.u32 %s27, 1
        %s177 = smul.addr %s176, 16
        %s178 = scalar_lea.vmem [#allocation2], %s177
        %p179 = pneg %p40
        %p180 = pneg %p37
        %s181 = sand.u32 %s53, 1
        %s182 = scalar_lea.sflag [#allocation5], %s181
        %s183 = sand.u32 %s53, 1
        %s184 = smul.addr %s183, 16
        %s185 = scalar_lea.vmem [#allocation4], %s184
        %p186 = pneg %p66
        %p187 = pneg %p63
        %p188 = pneg %p92
        %p189 = pneg %p89
        %p190 = scmp.lt.s32.totalorder %s19, 1
        %s191 = scalar_select %p190, %s19, 1
        %s192 = smul.addr %s191, 8
        %s193 = scalar_lea.vmem %s2, %s192
        %p194 = scmp.lt.s32.totalorder %s19, 1
        %s195 = scalar_select %p194, %s19, 1
        %s196 = smul.addr %s195, 8
        %s197 = scalar_lea.vmem %s2, %s196
        %v198 = vld [vmem:[%s160] sm:$0xff]
        %v199 = vld [vmem:[%s160 + $0x8] sm:$0xff]
        %v200 = vld [vmem:[%s169] sm:$0xff]
        %v201 = vld [vmem:[%s169 + $0x8] sm:$0xff]
        %vm202 = vcmp.eq.f32.partialorder %v200, 0.0
        %vm203 = vcmp.eq.f32.partialorder %v201, 0.0
        %v204 = vsel %vm202, %v198, 0.0
        %v205 = vsel %vm203, %v199, 0.0
        %v206 = vadd.f32 %v204, %v205
        %207 = vadd.xlane.f32.xlu0 %v206
        %v208 = vpop.xlane.xlu0 %207
        %vm209 = vcmask 7168
        %210 = vst.msk [vmem:[%s197] sm:$0xff] %vm209, %v208
        %p211 = scmp.lt.s32.totalorder %s19, 1
        %s212 = scalar_select %p211, %s19, 1
        %s213 = smul.addr %s212, 8
        %s214 = scalar_lea.vmem %s2, %s213
        // Predicated region
        $region37: #{tpu_custom_call.1} parent=27 // pred_check
          %p215 = pneg %p89
        $region38: #{tpu_custom_call.1} parent=27 // pred_check_branch
          %217 = sbr.rel (%p215) target = $region40
        $region39: #{tpu_custom_call.1} parent=27 // pred_region
          _
        $region40: #{tpu_custom_call.1} parent=27 // pred_fallthru
          _
      $region28: #{tpu_custom_call.1} parent=5 // pred_fallthru
        _
      %p218 = scmp.le.s32.totalorder 2, %s14
      // Predicated region
      $region41: #{tpu_custom_call.1} parent=5 // pred_check
        %p219 = pneg %p218
      $region42: #{tpu_custom_call.1} parent=5 // pred_check_branch
        %221 = sbr.rel (%p219) target = $region44
      $region43: #{tpu_custom_call.1} parent=5 // pred_region
        %s222 = ssub.s32 %s14, 2
        // Predicated region
        $region45: #{tpu_custom_call.1} parent=43 // pred_check
          %p223 = pneg %p95
        $region46: #{tpu_custom_call.1} parent=43 // pred_check_branch
          %225 = sbr.rel (%p223) target = $region48
        $region47: #{tpu_custom_call.1} parent=43 // pred_region
          %p226 = scmp.lt.s32.totalorder %s20, 1
          %s227 = scalar_select %p226, %s20, 1
          %s228 = smul.addr %s227, 8
          %s229 = scalar_lea.vmem %s2, %s228
        $region48: #{tpu_custom_call.1} parent=43 // pred_fallthru
          _
      $region44: #{tpu_custom_call.1} parent=5 // pred_fallthru
        _
    $region6: #{tpu_custom_call.1} parent=1 // loop_footer
      %s18 = sadd.s32 1, %s14
    $region7: #{tpu_custom_call.1} parent=1 // loop_footer_branch
      %13 = sbr.rel target = $region3
    $region8: #{tpu_custom_call.1} parent=1 // loop_exit
      _
    %230 = vsyncpa [#allocation3], 1
    %s231 = scalar_lea.sflag [#allocation3], 1
    %232 = vsyncpa %s231, 1
    %233 = vsyncpa [#allocation5], 1
    %s234 = scalar_lea.sflag [#allocation5], 1
    %235 = vsyncpa %s234, 1

</llo_original>
